<compile_context>
chip_gen: v7x
topology: tpu7x:2x2x1
jax: 0.10.0
libtpu: 0.0.40
codegen_flags: <defaults>
</compile_context>

<pallas_src>
import math

import jax
import jax.numpy as jnp
import numpy as np
from jax.experimental import pallas as pl
from jax.experimental.pallas import tpu as pltpu

B = 128          # batch for the demo run (any batch works; wrapper pads)
D = 16           # latent dim
NUM_SAMPLES = 2  # samples drawn per data point
K = 4            # number of planar flows
TILE_B = 128     # batch columns (lanes) per grid step

_LOG_2PI = math.log(2.0 * math.pi)


def _nf_vae_kernel(xT_ref, wT_ref, uhatT_ref, b_ref, wu_ref, zT_ref, lqp_ref):
    """Planar-flow chain + prior log-prob for one (D, TILE_B) column tile.

    Layout: rows = latent dims (sublanes), columns = batch*sample rows (lanes).
    """
    # q0 = Dirac: the latent for every sample is a copy of the x column tile.
    z = xT_ref[...].astype(jnp.float32)          # (D, TILE_B)
    wT = wT_ref[...].astype(jnp.float32)         # (D, K)
    uhT = uhatT_ref[...].astype(jnp.float32)     # (D, K)  precomputed u_hat^T

    d_lat = z.shape[0]
    n_cols = z.shape[1]
    n_flows = wT.shape[1]

    # Accumulate prod_k |1 + (w_k . u_hat_k) * h'(lin_k)|; take one log at the end.
    prod_absdet = jnp.ones((1, n_cols), jnp.float32)

    # n_flows is small and static: unrolled Python loop over flows.
    for k in range(n_flows):
        w_col = wT[:, k:k + 1]                   # (D, 1)
        u_col = uhT[:, k:k + 1]                  # (D, 1)
        b_k = b_ref[k]                           # scalar (SMEM)
        wu_k = wu_ref[k]                         # scalar (SMEM): w_k . u_hat_k

        lin = jnp.sum(z * w_col, axis=0, keepdims=True) + b_k     # (1, TILE_B)
        t = jnp.tanh(lin)                                         # (1, TILE_B)
        z = z + u_col * t                                         # (D, TILE_B)

        h_prime = 1.0 - t * t                                     # sech^2(lin)
        prod_absdet = prod_absdet * jnp.abs(1.0 + wu_k * h_prime)

    # q0 = Dirac => base log_q = 0; subtract the accumulated log-det.
    log_q = -jnp.log(prod_absdet)                                 # (1, TILE_B)

    # prior: standard normal log-prob, summed over latent dims.
    log_p = (-0.5 * d_lat * _LOG_2PI
             - 0.5 * jnp.sum(z * z, axis=0, keepdims=True))       # (1, TILE_B)
    # TODO(synk): decoder.log_prob(x, z) omitted (decoder=None in this instantiation).

    zT_ref[...] = z.astype(zT_ref.dtype)
    lqp_ref[...] = jnp.concatenate([log_q, log_p], axis=0)        # (2, TILE_B), lane-dense


def nf_vae_forward(x, w, u, b, num_samples=NUM_SAMPLES):
    """NormalizingFlowVAE.forward: returns (z, log_q, log_p) shaped (B,S,D)/(B,S)."""
    Bx, Dx = x.shape
    S = num_samples
    Kf = w.shape[0]

    # --- parameter-only math hoisted out of the kernel (depends on flow params only) ---
    w32 = w.astype(jnp.float32)
    u32 = u.astype(jnp.float32)
    inner = jnp.sum(w32 * u32, axis=1)                                   # (K,)
    wsq = jnp.sum(w32 * w32, axis=1)                                     # (K,)
    # invertibility-constrained u (normflows Planar parametrization)
    u_hat = u32 + ((jax.nn.softplus(inner) - 1.0 - inner) / wsq)[:, None] * w32   # (K, D)
    wu = jnp.sum(w32 * u_hat, axis=1).astype(jnp.float32)                # (K,)
    b_flat = b.reshape(-1).astype(jnp.float32)                           # (K,)

    # pad the batch so the lane axis is a dense multiple of TILE_B
    pad = (-Bx) % TILE_B
    x32 = x.astype(jnp.float32)
    if pad:
        x32 = jnp.concatenate([x32, jnp.zeros((pad, Dx), jnp.float32)], axis=0)
    Bp = Bx + pad
    NBT = Bp // TILE_B

    # transposed layouts: D on sublanes, batch/sample columns on lanes
    xT = x32.T                                                           # (D, Bp)
    wT = w32.T                                                           # (D, K)
    uhatT = u_hat.T                                                      # (D, K)

    zT, lqp = pl.pallas_call(
        _nf_vae_kernel,
        out_shape=(
            jax.ShapeDtypeStruct((Dx, S * Bp), jnp.float32),   # z^T, sample-major cols
            jax.ShapeDtypeStruct((2, S * Bp), jnp.float32),    # row0=log_q, row1=log_p
        ),
        grid=(S, NBT),
        in_specs=[
            # num_samples repeat folded into the index_map: every sample re-reads
            # the same x column tile (no repeated z0 ever hits HBM).
            pl.BlockSpec((Dx, TILE_B), lambda s, j: (0, j)),
            pl.BlockSpec((Dx, Kf), lambda s, j: (0, 0)),              # w^T (resident)
            pl.BlockSpec((Dx, Kf), lambda s, j: (0, 0)),              # u_hat^T (resident)
            pl.BlockSpec(memory_space=pltpu.MemorySpace.SMEM),        # b scalars
            pl.BlockSpec(memory_space=pltpu.MemorySpace.SMEM),        # w.u_hat scalars
        ],
        out_specs=(
            pl.BlockSpec((Dx, TILE_B), lambda s, j: (0, s * NBT + j)),
            pl.BlockSpec((2, TILE_B), lambda s, j: (0, s * NBT + j)),
        ),
        compiler_params=pltpu.CompilerParams(
            dimension_semantics=("parallel", "parallel")),
    )(xT, wT, uhatT, b_flat, wu)

    # reshape back to (B, num_samples, ...) exactly as the torch module does
    z_out = zT.reshape(Dx, S, Bp).transpose(2, 1, 0)[:Bx]                # (B, S, D)
    log_q = lqp[0].reshape(S, Bp).T[:Bx]                                 # (B, S)
    log_p = lqp[1].reshape(S, Bp).T[:Bx]                                 # (B, S)
    return z_out, log_q, log_p


def nf_vae_reference(x, w, u, b, num_samples=NUM_SAMPLES):
    """Pure-JAX reference matching the PyTorch semantics (for verification)."""
    Bx, Dx = x.shape
    Kf = w.shape[0]
    z = jnp.repeat(x[:, None, :], num_samples, axis=1).reshape(-1, Dx)
    log_q = jnp.zeros((z.shape[0],), jnp.float32)
    for k in range(Kf):
        wk, uk, bk = w[k], u[k], b[k, 0]
        inner = jnp.dot(wk, uk)
        u_hat = uk + (jax.nn.softplus(inner) - 1.0 - inner) * wk / jnp.dot(wk, wk)
        lin = z @ wk + bk
        t = jnp.tanh(lin)
        z = z + u_hat[None, :] * t[:, None]
        log_det = jnp.log(jnp.abs(1.0 + jnp.dot(wk, u_hat) * (1.0 - t * t)))
        log_q = log_q - log_det
    log_p = -0.5 * Dx * _LOG_2PI - 0.5 * jnp.sum(z * z, axis=-1)
    return (z.reshape(Bx, num_samples, Dx),
            log_q.reshape(Bx, num_samples),
            log_p.reshape(Bx, num_samples))


if __name__ == "__main__":
    key = jax.random.PRNGKey(0)
    kx, kw, ku, kb = jax.random.split(key, 4)

    # input data batch (already in latent space since q0 = Dirac)
    x = jax.random.normal(kx, (B, D), dtype=jnp.float32)

    # deterministic planar-flow parameter init (normflows-style uniform limits)
    lim_w = math.sqrt(2.0 / D)
    lim_u = math.sqrt(2.0)
    w = jax.random.uniform(kw, (K, D), jnp.float32, -lim_w, lim_w)
    u = jax.random.uniform(ku, (K, D), jnp.float32, -lim_u, lim_u)
    b = 0.1 * jax.random.normal(kb, (K, 1), dtype=jnp.float32)

    z_out, log_q, log_p = nf_vae_forward(x, w, u, b)
    jax.block_until_ready((z_out, log_q, log_p))

    z_ref, lq_ref, lp_ref = nf_vae_reference(x, w, u, b)
    assert z_out.shape == (B, NUM_SAMPLES, D)
    assert log_q.shape == (B, NUM_SAMPLES)
    assert log_p.shape == (B, NUM_SAMPLES)
    np.testing.assert_allclose(np.asarray(z_out), np.asarray(z_ref), rtol=1e-5, atol=1e-5)
    np.testing.assert_allclose(np.asarray(log_q), np.asarray(lq_ref), rtol=1e-5, atol=1e-5)
    np.testing.assert_allclose(np.asarray(log_p), np.asarray(lp_ref), rtol=1e-5, atol=1e-5)

    print("KERNEL_OK")
</pallas_src>

<mosaic_0001>
module attributes {stable_mosaic.version = 11 : i64} {
  func.func @_nf_vae_kernel(%arg0: i32, %arg1: i32, %arg2: memref<16x128xf32, #tpu.memory_space<vmem>>, %arg3: memref<16x4xf32, #tpu.memory_space<vmem>>, %arg4: memref<16x4xf32, #tpu.memory_space<vmem>>, %arg5: memref<4xf32, #tpu.memory_space<smem>>, %arg6: memref<4xf32, #tpu.memory_space<smem>>, %arg7: memref<16x128xf32, #tpu.memory_space<vmem>>, %arg8: memref<2x128xf32, #tpu.memory_space<vmem>>) attributes {dimension_semantics = [#tpu.dimension_semantics<parallel>, #tpu.dimension_semantics<parallel>], iteration_bounds = array<i64: 2, 1>, scalar_prefetch = 0 : i64, scratch_operands = 0 : i64, tpu.core_type = #tpu.core_type<tc>, window_params = [{transform_indices = @transform_0, window_bounds = array<i64: 16, 128>}, {pipeline_mode = #tpu.pipeline_mode<synchronous>, transform_indices = @transform_1, window_bounds = array<i64: 16, 4>}, {pipeline_mode = #tpu.pipeline_mode<synchronous>, transform_indices = @transform_2, window_bounds = array<i64: 16, 4>}, {transform_indices = @transform_3, window_bounds = array<i64: 4>}, {transform_indices = @transform_4, window_bounds = array<i64: 4>}, {transform_indices = @transform_5, window_bounds = array<i64: 16, 128>}, {transform_indices = @transform_6, window_bounds = array<i64: 2, 128>}]} {
    %c0 = arith.constant 0 : index
    %c0_0 = arith.constant 0 : index
    %0 = vector.load %arg2[%c0, %c0_0] : memref<16x128xf32, #tpu.memory_space<vmem>>, vector<16x128xf32>
    %c0_1 = arith.constant 0 : index
    %c0_2 = arith.constant 0 : index
    %1 = vector.load %arg3[%c0_1, %c0_2] : memref<16x4xf32, #tpu.memory_space<vmem>>, vector<16x4xf32>
    %c0_3 = arith.constant 0 : index
    %c0_4 = arith.constant 0 : index
    %2 = vector.load %arg4[%c0_3, %c0_4] : memref<16x4xf32, #tpu.memory_space<vmem>>, vector<16x4xf32>
    %cst = arith.constant 1.000000e+00 : f32
    %3 = vector.broadcast %cst : f32 to vector<1x128xf32>
    %4 = vector.extract_strided_slice %1 {offsets = [0, 0], sizes = [16, 1], strides = [1, 1]} : vector<16x4xf32> to vector<16x1xf32>
    %5 = vector.extract_strided_slice %2 {offsets = [0, 0], sizes = [16, 1], strides = [1, 1]} : vector<16x4xf32> to vector<16x1xf32>
    %c0_5 = arith.constant 0 : index
    %6 = memref.load %arg5[%c0_5] : memref<4xf32, #tpu.memory_space<smem>>
    %c0_6 = arith.constant 0 : index
    %7 = memref.load %arg6[%c0_6] : memref<4xf32, #tpu.memory_space<smem>>
    %8 = vector.broadcast %4 : vector<16x1xf32> to vector<16x128xf32>
    %9 = arith.mulf %0, %8 : vector<16x128xf32>
    %cst_7 = arith.constant dense<0.000000e+00> : vector<128xf32>
    %10 = vector.multi_reduction <add>, %9, %cst_7 [0] : vector<16x128xf32> to vector<128xf32>
    %11 = vector.shape_cast %10 : vector<128xf32> to vector<1x128xf32>
    %12 = vector.broadcast %6 : f32 to vector<1x128xf32>
    %13 = arith.addf %11, %12 : vector<1x128xf32>
    %14 = math.tanh %13 : vector<1x128xf32>
    %15 = vector.broadcast %5 : vector<16x1xf32> to vector<16x128xf32>
    %16 = vector.broadcast %14 : vector<1x128xf32> to vector<16x128xf32>
    %17 = arith.mulf %15, %16 : vector<16x128xf32>
    %18 = arith.addf %0, %17 : vector<16x128xf32>
    %19 = arith.mulf %14, %14 : vector<1x128xf32>
    %cst_8 = arith.constant 1.000000e+00 : f32
    %20 = vector.broadcast %cst_8 : f32 to vector<1x128xf32>
    %21 = arith.subf %20, %19 : vector<1x128xf32>
    %22 = vector.broadcast %7 : f32 to vector<1x128xf32>
    %23 = arith.mulf %22, %21 : vector<1x128xf32>
    %cst_9 = arith.constant 1.000000e+00 : f32
    %24 = vector.broadcast %cst_9 : f32 to vector<1x128xf32>
    %25 = arith.addf %24, %23 : vector<1x128xf32>
    %26 = math.absf %25 : vector<1x128xf32>
    %27 = arith.mulf %3, %26 : vector<1x128xf32>
    %28 = vector.extract_strided_slice %1 {offsets = [0, 1], sizes = [16, 1], strides = [1, 1]} : vector<16x4xf32> to vector<16x1xf32>
    %29 = vector.extract_strided_slice %2 {offsets = [0, 1], sizes = [16, 1], strides = [1, 1]} : vector<16x4xf32> to vector<16x1xf32>
    %c1 = arith.constant 1 : index
    %30 = memref.load %arg5[%c1] : memref<4xf32, #tpu.memory_space<smem>>
    %c1_10 = arith.constant 1 : index
    %31 = memref.load %arg6[%c1_10] : memref<4xf32, #tpu.memory_space<smem>>
    %32 = vector.broadcast %28 : vector<16x1xf32> to vector<16x128xf32>
    %33 = arith.mulf %18, %32 : vector<16x128xf32>
    %cst_11 = arith.constant dense<0.000000e+00> : vector<128xf32>
    %34 = vector.multi_reduction <add>, %33, %cst_11 [0] : vector<16x128xf32> to vector<128xf32>
    %35 = vector.shape_cast %34 : vector<128xf32> to vector<1x128xf32>
    %36 = vector.broadcast %30 : f32 to vector<1x128xf32>
    %37 = arith.addf %35, %36 : vector<1x128xf32>
    %38 = math.tanh %37 : vector<1x128xf32>
    %39 = vector.broadcast %29 : vector<16x1xf32> to vector<16x128xf32>
    %40 = vector.broadcast %38 : vector<1x128xf32> to vector<16x128xf32>
    %41 = arith.mulf %39, %40 : vector<16x128xf32>
    %42 = arith.addf %18, %41 : vector<16x128xf32>
    %43 = arith.mulf %38, %38 : vector<1x128xf32>
    %cst_12 = arith.constant 1.000000e+00 : f32
    %44 = vector.broadcast %cst_12 : f32 to vector<1x128xf32>
    %45 = arith.subf %44, %43 : vector<1x128xf32>
    %46 = vector.broadcast %31 : f32 to vector<1x128xf32>
    %47 = arith.mulf %46, %45 : vector<1x128xf32>
    %cst_13 = arith.constant 1.000000e+00 : f32
    %48 = vector.broadcast %cst_13 : f32 to vector<1x128xf32>
    %49 = arith.addf %48, %47 : vector<1x128xf32>
    %50 = math.absf %49 : vector<1x128xf32>
    %51 = arith.mulf %27, %50 : vector<1x128xf32>
    %52 = vector.extract_strided_slice %1 {offsets = [0, 2], sizes = [16, 1], strides = [1, 1]} : vector<16x4xf32> to vector<16x1xf32>
    %53 = vector.extract_strided_slice %2 {offsets = [0, 2], sizes = [16, 1], strides = [1, 1]} : vector<16x4xf32> to vector<16x1xf32>
    %c2 = arith.constant 2 : index
    %54 = memref.load %arg5[%c2] : memref<4xf32, #tpu.memory_space<smem>>
    %c2_14 = arith.constant 2 : index
    %55 = memref.load %arg6[%c2_14] : memref<4xf32, #tpu.memory_space<smem>>
    %56 = vector.broadcast %52 : vector<16x1xf32> to vector<16x128xf32>
    %57 = arith.mulf %42, %56 : vector<16x128xf32>
    %cst_15 = arith.constant dense<0.000000e+00> : vector<128xf32>
    %58 = vector.multi_reduction <add>, %57, %cst_15 [0] : vector<16x128xf32> to vector<128xf32>
    %59 = vector.shape_cast %58 : vector<128xf32> to vector<1x128xf32>
    %60 = vector.broadcast %54 : f32 to vector<1x128xf32>
    %61 = arith.addf %59, %60 : vector<1x128xf32>
    %62 = math.tanh %61 : vector<1x128xf32>
    %63 = vector.broadcast %53 : vector<16x1xf32> to vector<16x128xf32>
    %64 = vector.broadcast %62 : vector<1x128xf32> to vector<16x128xf32>
    %65 = arith.mulf %63, %64 : vector<16x128xf32>
    %66 = arith.addf %42, %65 : vector<16x128xf32>
    %67 = arith.mulf %62, %62 : vector<1x128xf32>
    %cst_16 = arith.constant 1.000000e+00 : f32
    %68 = vector.broadcast %cst_16 : f32 to vector<1x128xf32>
    %69 = arith.subf %68, %67 : vector<1x128xf32>
    %70 = vector.broadcast %55 : f32 to vector<1x128xf32>
    %71 = arith.mulf %70, %69 : vector<1x128xf32>
    %cst_17 = arith.constant 1.000000e+00 : f32
    %72 = vector.broadcast %cst_17 : f32 to vector<1x128xf32>
    %73 = arith.addf %72, %71 : vector<1x128xf32>
    %74 = math.absf %73 : vector<1x128xf32>
    %75 = arith.mulf %51, %74 : vector<1x128xf32>
    %76 = vector.extract_strided_slice %1 {offsets = [0, 3], sizes = [16, 1], strides = [1, 1]} : vector<16x4xf32> to vector<16x1xf32>
    %77 = vector.extract_strided_slice %2 {offsets = [0, 3], sizes = [16, 1], strides = [1, 1]} : vector<16x4xf32> to vector<16x1xf32>
    %c3 = arith.constant 3 : index
    %78 = memref.load %arg5[%c3] : memref<4xf32, #tpu.memory_space<smem>>
    %c3_18 = arith.constant 3 : index
    %79 = memref.load %arg6[%c3_18] : memref<4xf32, #tpu.memory_space<smem>>
    %80 = vector.broadcast %76 : vector<16x1xf32> to vector<16x128xf32>
    %81 = arith.mulf %66, %80 : vector<16x128xf32>
    %cst_19 = arith.constant dense<0.000000e+00> : vector<128xf32>
    %82 = vector.multi_reduction <add>, %81, %cst_19 [0] : vector<16x128xf32> to vector<128xf32>
    %83 = vector.shape_cast %82 : vector<128xf32> to vector<1x128xf32>
    %84 = vector.broadcast %78 : f32 to vector<1x128xf32>
    %85 = arith.addf %83, %84 : vector<1x128xf32>
    %86 = math.tanh %85 : vector<1x128xf32>
    %87 = vector.broadcast %77 : vector<16x1xf32> to vector<16x128xf32>
    %88 = vector.broadcast %86 : vector<1x128xf32> to vector<16x128xf32>
    %89 = arith.mulf %87, %88 : vector<16x128xf32>
    %90 = arith.addf %66, %89 : vector<16x128xf32>
    %91 = arith.mulf %86, %86 : vector<1x128xf32>
    %cst_20 = arith.constant 1.000000e+00 : f32
    %92 = vector.broadcast %cst_20 : f32 to vector<1x128xf32>
    %93 = arith.subf %92, %91 : vector<1x128xf32>
    %94 = vector.broadcast %79 : f32 to vector<1x128xf32>
    %95 = arith.mulf %94, %93 : vector<1x128xf32>
    %cst_21 = arith.constant 1.000000e+00 : f32
    %96 = vector.broadcast %cst_21 : f32 to vector<1x128xf32>
    %97 = arith.addf %96, %95 : vector<1x128xf32>
    %98 = math.absf %97 : vector<1x128xf32>
    %99 = arith.mulf %75, %98 : vector<1x128xf32>
    %100 = math.log %99 : vector<1x128xf32>
    %cst_22 = arith.constant 0.000000e+00 : f32
    %101 = vector.broadcast %cst_22 : f32 to vector<1x128xf32>
    %102 = arith.subf %101, %100 : vector<1x128xf32>
    %103 = arith.mulf %90, %90 : vector<16x128xf32>
    %cst_23 = arith.constant dense<0.000000e+00> : vector<128xf32>
    %104 = vector.multi_reduction <add>, %103, %cst_23 [0] : vector<16x128xf32> to vector<128xf32>
    %105 = vector.shape_cast %104 : vector<128xf32> to vector<1x128xf32>
    %cst_24 = arith.constant 5.000000e-01 : f32
    %106 = vector.broadcast %cst_24 : f32 to vector<1x128xf32>
    %107 = arith.mulf %106, %105 : vector<1x128xf32>
    %cst_25 = arith.constant -14.7030163 : f32
    %108 = vector.broadcast %cst_25 : f32 to vector<1x128xf32>
    %109 = arith.subf %108, %107 : vector<1x128xf32>
    %c0_26 = arith.constant 0 : index
    %c0_27 = arith.constant 0 : index
    %110 = vector.load %arg7[%c0_26, %c0_27] : memref<16x128xf32, #tpu.memory_space<vmem>>, vector<16x128xf32>
    tpu.vector_store %arg7[%c0_26, %c0_27], %90 {strides = array<i32>} : memref<16x128xf32, #tpu.memory_space<vmem>>, vector<16x128xf32>,
    %111 = tpu.concatenate %102, %109 in 0 : vector<1x128xf32>, vector<1x128xf32> -> vector<2x128xf32>
    %c0_28 = arith.constant 0 : index
    %c0_29 = arith.constant 0 : index
    %112 = vector.load %arg8[%c0_28, %c0_29] : memref<2x128xf32, #tpu.memory_space<vmem>>, vector<2x128xf32>
    tpu.vector_store %arg8[%c0_28, %c0_29], %111 {strides = array<i32>} : memref<2x128xf32, #tpu.memory_space<vmem>>, vector<2x128xf32>,
    return
  }
  func.func @transform_0(%arg0: i32, %arg1: i32) -> (i32, i32) {
    %c0_i32 = arith.constant 0 : i32
    %c0_i32_0 = arith.constant 0 : i32
    return %c0_i32, %arg1 : i32, i32
  }
  func.func @transform_1(%arg0: i32, %arg1: i32) -> (i32, i32) {
    %c0_i32 = arith.constant 0 : i32
    %c0_i32_0 = arith.constant 0 : i32
    %c0_i32_1 = arith.constant 0 : i32
    return %c0_i32, %c0_i32_0 : i32, i32
  }
  func.func @transform_2(%arg0: i32, %arg1: i32) -> (i32, i32) {
    %c0_i32 = arith.constant 0 : i32
    %c0_i32_0 = arith.constant 0 : i32
    %c0_i32_1 = arith.constant 0 : i32
    return %c0_i32, %c0_i32_0 : i32, i32
  }
  func.func @transform_3(%arg0: i32, %arg1: i32) -> i32 {
    %c0_i32 = arith.constant 0 : i32
    %c0_i32_0 = arith.constant 0 : i32
    return %c0_i32 : i32
  }
  func.func @transform_4(%arg0: i32, %arg1: i32) -> i32 {
    %c0_i32 = arith.constant 0 : i32
    %c0_i32_0 = arith.constant 0 : i32
    return %c0_i32 : i32
  }
  func.func @transform_5(%arg0: i32, %arg1: i32) -> (i32, i32) {
    %c1_i32 = arith.constant 1 : i32
    %0 = arith.muli %arg0, %c1_i32 : i32
    %1 = arith.addi %0, %arg1 : i32
    %c0_i32 = arith.constant 0 : i32
    %c0_i32_0 = arith.constant 0 : i32
    return %c0_i32, %1 : i32, i32
  }
  func.func @transform_6(%arg0: i32, %arg1: i32) -> (i32, i32) {
    %c1_i32 = arith.constant 1 : i32
    %0 = arith.muli %arg0, %c1_i32 : i32
    %1 = arith.addi %0, %arg1 : i32
    %c0_i32 = arith.constant 0 : i32
    %c0_i32_0 = arith.constant 0 : i32
    return %c0_i32, %1 : i32, i32
  }
}

</mosaic_0001>

<llo_original>
// kernel: tpu_custom_call.1
$region0: #{tpu_custom_call.1}
  #allocation0 [shape = 'u32[]', space=smem, size = 0x4, offset = 0x4, fixed_abs, tag = 'smem constant byte address 0x4 - core index']
  #allocation1 [shape = 'u32[144,128]{1,0:T(1,128)}', space=vmem, size = 0x12000, scoped, tag = 'internal scratch']
  %s0 = inlined_call_operand.vmem [shape: f32[16,128], index: 0, kind: input, shape index: {}]
  %s1 = inlined_call_operand.vmem [shape: f32[16,4], index: 1, kind: input, shape index: {}]
  %s2 = inlined_call_operand.vmem [shape: f32[16,4], index: 2, kind: input, shape index: {}]
  %s3 = inlined_call_operand.vmem [shape: f32[4], index: 3, kind: input, shape index: {}]
  %s4 = inlined_call_operand.vmem [shape: f32[4], index: 4, kind: input, shape index: {}]
  %s5 = inlined_call_operand.hbm [shape: f32[16,256], index: 5, kind: output, shape index: {0}]
  %s6 = inlined_call_operand.hbm [shape: f32[2,256], index: 6, kind: output, shape index: {1}]
  %7 = xla_tuple %s5, %s6
  %s8 = sld [smem:[#allocation0]]
  $region69: #{tpu_custom_call.1} parent=0
    _
  %s10 = ssub.s32 1, %s8
  %s11 = scalar_select 0, %s10, %s8
  $region1: #{tpu_custom_call.1} parent=0
    #allocation2 [shape = 'u8[512]{0}', space=smem, size = 0x200, scoped, tag = 'input window, operand 3, single buffered']
    #allocation3 [shape = 's32[2]{0}', space=sflag, size = 0x8, scoped, tag = 'scoped memory for tpu_custom_call.1']
    #allocation4 [shape = 's32[2]{0}', space=sflag, size = 0x8, scoped, tag = 'scoped memory for tpu_custom_call.1']
    #allocation5 [shape = 'u8[512]{0}', space=smem, size = 0x200, scoped, tag = 'input window, operand 4, single buffered']
    #allocation6 [shape = 's32[1]{0}', space=sflag, size = 0x4, scoped, tag = 'scoped memory for tpu_custom_call.1']
    #allocation7 [shape = 'u8[16384]{0}', space=vmem, size = 0x4000, scoped, tag = 'output window, operand 0']
    #allocation8 [shape = 'u8[2048]{0}', space=vmem, size = 0x800, scoped, tag = 'output window, operand 1']
    #allocation9 [shape = 's32[2]{0}', space=sflag, size = 0x8, scoped, tag = 'scoped memory for tpu_custom_call.1']
    %12 = vsyncpa [#allocation4], 0
    %13 = vsyncpa [#allocation6], 0
    %14 = vsyncpa [#allocation3], 0
    %s15 = scalar_lea.sflag [#allocation3], 1
    %16 = vsyncpa %s15, 0
    %17 = vsyncpa [#allocation9], 0
    %s18 = scalar_lea.sflag [#allocation9], 1
    %19 = vsyncpa %s18, 0
    loop: start=0, step=1, limit=4
    $region2: #{tpu_custom_call.1} parent=1 // loop_pre_header
      _
    $region3: #{tpu_custom_call.1} parent=1 // loop_header
      %s21 = sphi 0, %s25
      %p22 = scmp.ge.s32.totalorder %s21, 4
      %s28 = sphi 0, %s40
      %s29 = sphi 0, %s36
      %s30 = sphi 0, %s28
      %s31 = sphi 0, %s29
      %s32 = sphi 0, %s30
      %s33 = sphi 0, %s31
      %s43 = sphi 0, %s45
      %s46 = sphi 0, %s43
      %s47 = sphi 0, %s46
      %s63 = sphi 0, %s47
      %s67 = sphi 0, %s67
      %s69 = sphi 0, %s67
      %s70 = sphi 0, %s69
      %s84 = sphi 0, %s70
      %s88 = sphi 0, %s88
      %s90 = sphi 0, %s88
      %s91 = sphi 0, %s90
      %s105 = sphi 0, %s91
      %s109 = sphi 0, %s109
      %s111 = sphi 0, %s109
      %s112 = sphi 0, %s111
      %s126 = sphi 0, %s112
      %s130 = sphi 0, %s130
      %s132 = sphi 0, %s130
      %s133 = sphi 0, %s132
      %s147 = sphi 0, %s133
      %s155 = sphi 0, %s157
      %s158 = sphi 0, %s155
      %s159 = sphi 0, %s158
      %s175 = sphi 0, %s159
      %s183 = sphi 0, %s185
      %s186 = sphi 0, %s183
      %s187 = sphi 0, %s186
      %s203 = sphi 0, %s187
    $region4: #{tpu_custom_call.1} parent=1 // loop_header_branch
      %24 = sbr.rel (%p22) target = $region8
    $region5: #{tpu_custom_call.1} parent=1 // loop_body
      %s26 = ssub.s32 %s21, 1
      %s27 = ssub.s32 %s21, 2
      %s34 = sadd.s32 1, %s29
      %p35 = scmp.ge.s32.totalorder %s34, 1
      %s36 = scalar_select %p35, 0, %s34
      %s37 = sadd.s32 1, %s28
      %s38 = scalar_select %p35, %s37, %s28
      %p39 = scmp.ge.s32.totalorder %s38, 2
      %s40 = scalar_select %p39, 0, %s38
      %s41 = ssub.s32 %s29, %s36
      %p42 = scmp.eq.s32.totalorder %s41, 0
      %s44 = sadd.s32 %s43, 1
      %s45 = scalar_select %p42, %s43, %s44
      %p48 = pneg %p42
      %p49 = scmp.eq.s32.totalorder %s21, 1
      %p50 = por %p48, %p49
      %p51 = scmp.ne.s32.totalorder %s43, %s46
      %p52 = scmp.eq.s32.totalorder %s21, 0
      %p53 = por %p51, %p52
      %p54 = scmp.ne.s32.totalorder %s43, %s46
      %p55 = scmp.eq.s32.totalorder %s26, 1
      %p56 = por %p54, %p55
      %p57 = scmp.ne.s32.totalorder %s46, %s47
      %p58 = scmp.eq.s32.totalorder %s26, 0
      %p59 = por %p57, %p58
      %p60 = scmp.ne.s32.totalorder %s46, %s47
      %p61 = scmp.eq.s32.totalorder %s27, 1
      %p62 = por %p60, %p61
      %p64 = scmp.ne.s32.totalorder %s47, %s63
      %p65 = scmp.eq.s32.totalorder %s27, 0
      %p66 = por %p64, %p65
      %s68 = sadd.s32 %s67, 1
      %p71 = scmp.eq.s32.totalorder %s21, 1
      %p72 = scmp.ne.s32.totalorder %s67, %s69
      %p73 = scmp.eq.s32.totalorder %s21, 0
      %p74 = por %p72, %p73
      %p75 = scmp.ne.s32.totalorder %s67, %s69
      %p76 = scmp.eq.s32.totalorder %s26, 1
      %p77 = por %p75, %p76
      %p78 = scmp.ne.s32.totalorder %s69, %s70
      %p79 = scmp.eq.s32.totalorder %s26, 0
      %p80 = por %p78, %p79
      %p81 = scmp.ne.s32.totalorder %s69, %s70
      %p82 = scmp.eq.s32.totalorder %s27, 1
      %p83 = por %p81, %p82
      %p85 = scmp.ne.s32.totalorder %s70, %s84
      %p86 = scmp.eq.s32.totalorder %s27, 0
      %p87 = por %p85, %p86
      %s89 = sadd.s32 %s88, 1
      %p92 = scmp.eq.s32.totalorder %s21, 1
      %p93 = scmp.ne.s32.totalorder %s88, %s90
      %p94 = scmp.eq.s32.totalorder %s21, 0
      %p95 = por %p93, %p94
      %p96 = scmp.ne.s32.totalorder %s88, %s90
      %p97 = scmp.eq.s32.totalorder %s26, 1
      %p98 = por %p96, %p97
      %p99 = scmp.ne.s32.totalorder %s90, %s91
      %p100 = scmp.eq.s32.totalorder %s26, 0
      %p101 = por %p99, %p100
      %p102 = scmp.ne.s32.totalorder %s90, %s91
      %p103 = scmp.eq.s32.totalorder %s27, 1
      %p104 = por %p102, %p103
      %p106 = scmp.ne.s32.totalorder %s91, %s105
      %p107 = scmp.eq.s32.totalorder %s27, 0
      %p108 = por %p106, %p107
      %s110 = sadd.s32 %s109, 1
      %p113 = scmp.eq.s32.totalorder %s21, 1
      %p114 = scmp.ne.s32.totalorder %s109, %s111
      %p115 = scmp.eq.s32.totalorder %s21, 0
      %p116 = por %p114, %p115
      %p117 = scmp.ne.s32.totalorder %s109, %s111
      %p118 = scmp.eq.s32.totalorder %s26, 1
      %p119 = por %p117, %p118
      %p120 = scmp.ne.s32.totalorder %s111, %s112
      %p121 = scmp.eq.s32.totalorder %s26, 0
      %p122 = por %p120, %p121
      %p123 = scmp.ne.s32.totalorder %s111, %s112
      %p124 = scmp.eq.s32.totalorder %s27, 1
      %p125 = por %p123, %p124
      %p127 = scmp.ne.s32.totalorder %s112, %s126
      %p128 = scmp.eq.s32.totalorder %s27, 0
      %p129 = por %p127, %p128
      %s131 = sadd.s32 %s130, 1
      %p134 = scmp.eq.s32.totalorder %s21, 1
      %p135 = scmp.ne.s32.totalorder %s130, %s132
      %p136 = scmp.eq.s32.totalorder %s21, 0
      %p137 = por %p135, %p136
      %p138 = scmp.ne.s32.totalorder %s130, %s132
      %p139 = scmp.eq.s32.totalorder %s26, 1
      %p140 = por %p138, %p139
      %p141 = scmp.ne.s32.totalorder %s132, %s133
      %p142 = scmp.eq.s32.totalorder %s26, 0
      %p143 = por %p141, %p142
      %p144 = scmp.ne.s32.totalorder %s132, %s133
      %p145 = scmp.eq.s32.totalorder %s27, 1
      %p146 = por %p144, %p145
      %p148 = scmp.ne.s32.totalorder %s133, %s147
      %p149 = scmp.eq.s32.totalorder %s27, 0
      %p150 = por %p148, %p149
      %s151 = sadd.s32 %s28, %s29
      %s152 = sadd.s32 %s40, %s36
      %s153 = ssub.s32 %s151, %s152
      %p154 = scmp.eq.s32.totalorder %s153, 0
      %s156 = sadd.s32 %s155, 1
      %s157 = scalar_select %p154, %s155, %s156
      %p160 = pneg %p154
      %p161 = scmp.eq.s32.totalorder %s21, 1
      %p162 = por %p160, %p161
      %p163 = scmp.ne.s32.totalorder %s155, %s158
      %p164 = scmp.eq.s32.totalorder %s21, 0
      %p165 = por %p163, %p164
      %p166 = scmp.ne.s32.totalorder %s155, %s158
      %p167 = scmp.eq.s32.totalorder %s26, 1
      %p168 = por %p166, %p167
      %p169 = scmp.ne.s32.totalorder %s158, %s159
      %p170 = scmp.eq.s32.totalorder %s26, 0
      %p171 = por %p169, %p170
      %p172 = scmp.ne.s32.totalorder %s158, %s159
      %p173 = scmp.eq.s32.totalorder %s27, 1
      %p174 = por %p172, %p173
      %p176 = scmp.ne.s32.totalorder %s159, %s175
      %p177 = scmp.eq.s32.totalorder %s27, 0
      %p178 = por %p176, %p177
      %s179 = sadd.s32 %s28, %s29
      %s180 = sadd.s32 %s40, %s36
      %s181 = ssub.s32 %s179, %s180
      %p182 = scmp.eq.s32.totalorder %s181, 0
      %s184 = sadd.s32 %s183, 1
      %s185 = scalar_select %p182, %s183, %s184
      %p188 = pneg %p182
      %p189 = scmp.eq.s32.totalorder %s21, 1
      %p190 = por %p188, %p189
      %p191 = scmp.ne.s32.totalorder %s183, %s186
      %p192 = scmp.eq.s32.totalorder %s21, 0
      %p193 = por %p191, %p192
      %p194 = scmp.ne.s32.totalorder %s183, %s186
      %p195 = scmp.eq.s32.totalorder %s26, 1
      %p196 = por %p194, %p195
      %p197 = scmp.ne.s32.totalorder %s186, %s187
      %p198 = scmp.eq.s32.totalorder %s26, 0
      %p199 = por %p197, %p198
      %p200 = scmp.ne.s32.totalorder %s186, %s187
      %p201 = scmp.eq.s32.totalorder %s27, 1
      %p202 = por %p200, %p201
      %p204 = scmp.ne.s32.totalorder %s187, %s203
      %p205 = scmp.eq.s32.totalorder %s27, 0
      %p206 = por %p204, %p205
      %p207 = scmp.le.s32.totalorder 1, %s21
      %p208 = scmp.lt.s32.totalorder %s21, 3
      %p209 = pnand %p207, %p208
      %p210 = pneg %p209
      // Predicated region
      $region9: #{tpu_custom_call.1} parent=5 // pred_check
        _
      $region10: #{tpu_custom_call.1} parent=5 // pred_check_branch
        %212 = sbr.rel (%p209) target = $region12
      $region11: #{tpu_custom_call.1} parent=5 // pred_region
        %s213 = ssub.s32 %s21, 1
        // Predicated region
        $region13: #{tpu_custom_call.1} parent=11 // pred_check
          %p214 = pneg %p59
        $region14: #{tpu_custom_call.1} parent=11 // pred_check_branch
          %216 = sbr.rel (%p214) target = $region16
        $region15: #{tpu_custom_call.1} parent=11 // pred_region
          %p217 = scmp.lt.s32.totalorder %s31, 0
          %s218 = scalar_select %p217, %s31, 0
          %s219 = smul.addr %s218, 8
          %s220 = scalar_lea.vmem %s0, %s219
        $region16: #{tpu_custom_call.1} parent=11 // pred_fallthru
          _
        // Predicated region
        $region17: #{tpu_custom_call.1} parent=11 // pred_check
          %p221 = pneg %p80
        $region18: #{tpu_custom_call.1} parent=11 // pred_check_branch
          %223 = sbr.rel (%p221) target = $region20
        $region19: #{tpu_custom_call.1} parent=11 // pred_region
          _
        $region20: #{tpu_custom_call.1} parent=11 // pred_fallthru
          _
        // Predicated region
        $region21: #{tpu_custom_call.1} parent=11 // pred_check
          %p224 = pneg %p101
        $region22: #{tpu_custom_call.1} parent=11 // pred_check_branch
          %226 = sbr.rel (%p224) target = $region24
        $region23: #{tpu_custom_call.1} parent=11 // pred_region
          _
        $region24: #{tpu_custom_call.1} parent=11 // pred_fallthru
          _
        // Predicated region
        $region25: #{tpu_custom_call.1} parent=11 // pred_check
          %p227 = pneg %p122
        $region26: #{tpu_custom_call.1} parent=11 // pred_check_branch
          %229 = sbr.rel (%p227) target = $region28
        $region27: #{tpu_custom_call.1} parent=11 // pred_region
          %s231 = ssub.s32 16, 16
          %232 = vsyncadd [#allocation4], %s231
          %s234 = sshll.u32 %s3, 4
          %s235 = int_to_ptr.vmem [resolvable:$true] %s234
          %237 = dma.vmem_to_smem %s235, 16, [#allocation2], [#allocation4]
        $region28: #{tpu_custom_call.1} parent=11 // pred_fallthru
          _
        // Predicated region
        $region29: #{tpu_custom_call.1} parent=11 // pred_check
          %p238 = pneg %p143
        $region30: #{tpu_custom_call.1} parent=11 // pred_check_branch
          %240 = sbr.rel (%p238) target = $region32
        $region31: #{tpu_custom_call.1} parent=11 // pred_region
          %s242 = ssub.s32 16, 16
          %243 = vsyncadd [#allocation6], %s242
          %s245 = sshll.u32 %s4, 4
          %s246 = int_to_ptr.vmem [resolvable:$true] %s245
          %248 = dma.vmem_to_smem %s246, 16, [#allocation5], [#allocation6]
        $region32: #{tpu_custom_call.1} parent=11 // pred_fallthru
          _
      $region12: #{tpu_custom_call.1} parent=5 // pred_fallthru
        _
      %p249 = scmp.lt.s32.totalorder %s21, 2
      // Predicated region
      $region33: #{tpu_custom_call.1} parent=5 // pred_check
        %p250 = pneg %p249
      $region34: #{tpu_custom_call.1} parent=5 // pred_check_branch
        %252 = sbr.rel (%p250) target = $region36
      $region35: #{tpu_custom_call.1} parent=5 // pred_region
        _
      $region36: #{tpu_custom_call.1} parent=5 // pred_fallthru
        _
      %p253 = scmp.le.s32.totalorder 1, %s21
      %p254 = scmp.lt.s32.totalorder %s21, 3
      %p255 = pnand %p253, %p254
      %p256 = pneg %p255
      // Predicated region
      $region37: #{tpu_custom_call.1} parent=5 // pred_check
        _
      $region38: #{tpu_custom_call.1} parent=5 // pred_check_branch
        %258 = sbr.rel (%p255) target = $region40
      $region39: #{tpu_custom_call.1} parent=5 // pred_region
        %s259 = ssub.s32 %s21, 1
        // Predicated region
        $region41: #{tpu_custom_call.1} parent=39 // pred_check
          %p260 = pneg %p122
        $region42: #{tpu_custom_call.1} parent=39 // pred_check_branch
          %262 = sbr.rel (%p260) target = $region44
        $region43: #{tpu_custom_call.1} parent=39 // pred_region
          %263 = dma.done [#allocation4], 16
        $region44: #{tpu_custom_call.1} parent=39 // pred_fallthru
          _
        // Predicated region
        $region45: #{tpu_custom_call.1} parent=39 // pred_check
          %p264 = pneg %p143
        $region46: #{tpu_custom_call.1} parent=39 // pred_check_branch
          %266 = sbr.rel (%p264) target = $region48
        $region47: #{tpu_custom_call.1} parent=39 // pred_region
          %267 = dma.done [#allocation6], 16
        $region48: #{tpu_custom_call.1} parent=39 // pred_fallthru
          _
        %268 = sfence
        %p269 = scmp.lt.s32.totalorder %s31, 0
        %s270 = scalar_select %p269, %s31, 0
        %s271 = smul.addr %s270, 8
        %s272 = scalar_lea.vmem %s0, %s271
        %p273 = pneg %p59
        %p274 = pneg %p56
        %p275 = pneg %p80
        %p276 = pneg %p77
        %p277 = pneg %p101
        %p278 = pneg %p98
        %p279 = pneg %p122
        %p280 = pneg %p119
        %p281 = pneg %p143
        %p282 = pneg %p140
        %p283 = pneg %p171
        %p284 = pneg %p168
        %s285 = sand.u32 %s158, 1
        %s286 = scalar_lea.sflag [#allocation3], %s285
        %s287 = sand.u32 %s158, 1
        %s288 = smul.addr %s287, 16
        %s289 = scalar_lea.vmem [#allocation7], %s288
        %p290 = pneg %p199
        %p291 = pneg %p196
        %s292 = sand.u32 %s186, 1
        %s293 = scalar_lea.sflag [#allocation9], %s292
        %s294 = sand.u32 %s186, 1
        %s295 = smul.addr %s294, 2
        %s296 = scalar_lea.vmem [#allocation8], %s295
        %p297 = scmp.lt.s32.totalorder %s31, 0
        %s298 = scalar_select %p297, %s31, 0
        %s299 = smul.addr %s298, 8
        %s300 = scalar_lea.vmem %s0, %s299
        %s301 = sadd.s32 %s30, %s31
        %s302 = sadd.s32 %s30, %s31
        %v303 = vld [vmem:[%s300] sm:$0xff]
        %v304 = vld [vmem:[%s300 + $0x8] sm:$0xff]
        %v305 = vld [vmem:[%s1] sm:$0xff]
        %v306 = vld [vmem:[%s1 + $0x8] sm:$0xff]
        %v307 = vld [vmem:[%s2] sm:$0xff]
        %v308 = vld [vmem:[%s2 + $0x8] sm:$0xff]
        %s309 = sld [smem:[#allocation2]]
        %s310 = sld [smem:[#allocation5]]
        %312 = vset.pattern.permute.xlu0 0
        %313 = vperm.xlu0 %312, %v305
        %v314 = vpop.permute.xlu0 %313
        %317 = vset.pattern.permute.xlu0 0
        %318 = vperm.xlu0 %317, %v306
        %v319 = vpop.permute.xlu0 %318
        %v321 = vmul.f32 %v303, %v314
        %v322 = vmul.f32 %v304, %v319
        %v323 = vadd.f32 %v321, %v322
        %v324 = vrot.slane %v323, 4
        %v325 = vadd.f32 %v323, %v324
        %v326 = vrot.slane %v325, 2
        %v327 = vadd.f32 %v325, %v326
        %v328 = vrot.slane %v327, 1
        %v329 = vadd.f32 %v327, %v328
        %v330 = vstv %s309
        %v331 = vadd.f32 %v329, %v330
        %v332 = vtanh.pop %v331
        %334 = vset.pattern.permute.xlu0 0
        %335 = vperm.xlu0 %334, %v307
        %v336 = vpop.permute.xlu0 %335
        %339 = vset.pattern.permute.xlu0 0
        %340 = vperm.xlu0 %339, %v308
        %v341 = vpop.permute.xlu0 %340
        %v343 = vmul.f32 %v336, %v332
        %v344 = vmul.f32 %v341, %v332
        %v345 = vadd.f32 %v303, %v343
        %v346 = vadd.f32 %v304, %v344
        %v347 = vmul.f32 %v332, %v332
        %v348 = vsub.f32 1.0, %v347
        %v349 = vstv %s310
        %v350 = vmul.f32 %v349, %v348
        %v351 = vadd.f32 %v350, 1.0
        %v352 = vand.u32 2147483647, %v351
        %s353 = sld [smem:[#allocation2 + $0x1]]
        %s354 = sld [smem:[#allocation5 + $0x1]]
        %355 = vset.pattern.permute.xlu0 1
        %356 = vperm.xlu0 %355, %v305
        %v357 = vpop.permute.xlu0 %356
        %359 = vset.pattern.permute.xlu0 1
        %360 = vperm.xlu0 %359, %v306
        %v361 = vpop.permute.xlu0 %360
        %v363 = vmul.f32 %v345, %v357
        %v364 = vmul.f32 %v346, %v361
        %v365 = vadd.f32 %v363, %v364
        %v366 = vrot.slane %v365, 4
        %v367 = vadd.f32 %v365, %v366
        %v368 = vrot.slane %v367, 2
        %v369 = vadd.f32 %v367, %v368
        %v370 = vrot.slane %v369, 1
        %v371 = vadd.f32 %v369, %v370
        %v372 = vstv %s353
        %v373 = vadd.f32 %v371, %v372
        %v374 = vtanh.pop %v373
        %375 = vset.pattern.permute.xlu0 1
        %376 = vperm.xlu0 %375, %v307
        %v377 = vpop.permute.xlu0 %376
        %379 = vset.pattern.permute.xlu0 1
        %380 = vperm.xlu0 %379, %v308
        %v381 = vpop.permute.xlu0 %380
        %v383 = vmul.f32 %v377, %v374
        %v384 = vmul.f32 %v381, %v374
        %v385 = vadd.f32 %v345, %v383
        %v386 = vadd.f32 %v346, %v384
        %v387 = vmul.f32 %v374, %v374
        %v388 = vsub.f32 1.0, %v387
        %v389 = vstv %s354
        %v390 = vmul.f32 %v389, %v388
        %v391 = vadd.f32 %v390, 1.0
        %v392 = vand.u32 2147483647, %v391
        %v393 = vmul.f32 %v352, %v392
        %s394 = sld [smem:[#allocation2 + $0x2]]
        %s395 = sld [smem:[#allocation5 + $0x2]]
        %396 = vset.pattern.permute.xlu0 2
        %397 = vperm.xlu0 %396, %v305
        %v398 = vpop.permute.xlu0 %397
        %400 = vset.pattern.permute.xlu0 2
        %401 = vperm.xlu0 %400, %v306
        %v402 = vpop.permute.xlu0 %401
        %v404 = vmul.f32 %v385, %v398
        %v405 = vmul.f32 %v386, %v402
        %v406 = vadd.f32 %v404, %v405
        %v407 = vrot.slane %v406, 4
        %v408 = vadd.f32 %v406, %v407
        %v409 = vrot.slane %v408, 2
        %v410 = vadd.f32 %v408, %v409
        %v411 = vrot.slane %v410, 1
        %v412 = vadd.f32 %v410, %v411
        %v413 = vstv %s394
        %v414 = vadd.f32 %v412, %v413
        %v415 = vtanh.pop %v414
        %416 = vset.pattern.permute.xlu0 2
        %417 = vperm.xlu0 %416, %v307
        %v418 = vpop.permute.xlu0 %417
        %420 = vset.pattern.permute.xlu0 2
        %421 = vperm.xlu0 %420, %v308
        %v422 = vpop.permute.xlu0 %421
        %v424 = vmul.f32 %v418, %v415
        %v425 = vmul.f32 %v422, %v415
        %v426 = vadd.f32 %v385, %v424
        %v427 = vadd.f32 %v386, %v425
        %v428 = vmul.f32 %v415, %v415
        %v429 = vsub.f32 1.0, %v428
        %v430 = vstv %s395
        %v431 = vmul.f32 %v430, %v429
        %v432 = vadd.f32 %v431, 1.0
        %v433 = vand.u32 2147483647, %v432
        %v434 = vmul.f32 %v393, %v433
        %s435 = sld [smem:[#allocation2 + $0x3]]
        %s436 = sld [smem:[#allocation5 + $0x3]]
        %437 = vset.pattern.permute.xlu0 3
        %438 = vperm.xlu0 %437, %v305
        %v439 = vpop.permute.xlu0 %438
        %441 = vset.pattern.permute.xlu0 3
        %442 = vperm.xlu0 %441, %v306
        %v443 = vpop.permute.xlu0 %442
        %v445 = vmul.f32 %v426, %v439
        %v446 = vmul.f32 %v427, %v443
        %v447 = vadd.f32 %v445, %v446
        %v448 = vrot.slane %v447, 4
        %v449 = vadd.f32 %v447, %v448
        %v450 = vrot.slane %v449, 2
        %v451 = vadd.f32 %v449, %v450
        %v452 = vrot.slane %v451, 1
        %v453 = vadd.f32 %v451, %v452
        %v454 = vstv %s435
        %v455 = vadd.f32 %v453, %v454
        %v456 = vtanh.pop %v455
        %457 = vset.pattern.permute.xlu0 3
        %458 = vperm.xlu0 %457, %v307
        %v459 = vpop.permute.xlu0 %458
        %461 = vset.pattern.permute.xlu0 3
        %462 = vperm.xlu0 %461, %v308
        %v463 = vpop.permute.xlu0 %462
        %v465 = vmul.f32 %v459, %v456
        %v466 = vmul.f32 %v463, %v456
        %v467 = vadd.f32 %v426, %v465
        %v468 = vadd.f32 %v427, %v466
        %v469 = vmul.f32 %v456, %v456
        %v470 = vsub.f32 1.0, %v469
        %v471 = vstv %s436
        %v472 = vmul.f32 %v471, %v470
        %v473 = vadd.f32 %v472, 1.0
        %v474 = vand.u32 2147483647, %v473
        %v475 = vmul.f32 %v434, %v474
        %v476 = vlog2.pop %v475
        %v477 = vmul.f32 %v476, 0.6931472
        %v478 = vsub.f32 0.0, %v477
        %v479 = vmul.f32 %v467, %v467
        %v480 = vmul.f32 %v468, %v468
        %v481 = vadd.f32 %v479, %v480
        %v482 = vrot.slane %v481, 4
        %v483 = vadd.f32 %v481, %v482
        %v484 = vrot.slane %v483, 2
        %v485 = vadd.f32 %v483, %v484
        %v486 = vrot.slane %v485, 1
        %v487 = vadd.f32 %v485, %v486
        %v488 = vmul.f32 %v487, 0.5
        %v489 = vsub.f32 -14.703016, %v488
        %490 = vst [vmem:[%s289] sm:$0xff] %v467
        %491 = vst [vmem:[%s289 + $0x8] sm:$0xff] %v468
        %vm492 = vcmask 1040384
        %v493 = vsel %vm492, %v478, %v489
        %494 = vst [vmem:[%s296] sm:$0x3] %v493
        %s495 = sand.u32 %s158, 1
        %s496 = scalar_lea.sflag [#allocation3], %s495
        %s497 = sand.u32 %s158, 1
        %s498 = smul.addr %s497, 16
        %s499 = scalar_lea.vmem [#allocation7], %s498
        %s500 = sand.u32 %s186, 1
        %s501 = scalar_lea.sflag [#allocation9], %s500
        %s502 = sand.u32 %s186, 1
        %s503 = smul.addr %s502, 2
        %s504 = scalar_lea.vmem [#allocation8], %s503
        // Predicated region
        $region49: #{tpu_custom_call.1} parent=39 // pred_check
          %p505 = pneg %p168
        $region50: #{tpu_custom_call.1} parent=39 // pred_check_branch
          %507 = sbr.rel (%p505) target = $region52
        $region51: #{tpu_custom_call.1} parent=39 // pred_region
          %s508 = sadd.s32 %s30, %s31
          %s510 = ssub.s32 256, 256
          %511 = vsyncadd %s496, %s510
          %s512 = smul.addr %s508, 128
          %s513 = scalar_lea.hbm %s5, %s512
          %s514 = sshll.u32 %s499, 4
          %s515 = int_to_ptr.vmem [resolvable:$true] %s514
          %520 = dma.vmem_to_hbm [thread:$0]  %s515, 256, %s513, %s496, 128, 256, 8
        $region52: #{tpu_custom_call.1} parent=39 // pred_fallthru
          _
        // Predicated region
        $region53: #{tpu_custom_call.1} parent=39 // pred_check
          %p521 = pneg %p196
        $region54: #{tpu_custom_call.1} parent=39 // pred_check_branch
          %523 = sbr.rel (%p521) target = $region56
        $region55: #{tpu_custom_call.1} parent=39 // pred_region
          %s524 = sadd.s32 %s30, %s31
          %s526 = ssub.s32 32, 32
          %527 = vsyncadd %s501, %s526
          %s528 = smul.addr %s524, 32
          %s529 = scalar_lea.hbm %s6, %s528
          %s531 = sshll.u32 %s504, 4
          %s532 = int_to_ptr.vmem [resolvable:$true] %s531
          %534 = dma.vmem_to_hbm [thread:$0]  %s532, 32, %s529, %s501
        $region56: #{tpu_custom_call.1} parent=39 // pred_fallthru
          _
      $region40: #{tpu_custom_call.1} parent=5 // pred_fallthru
        _
      %p535 = scmp.le.s32.totalorder 2, %s21
      // Predicated region
      $region57: #{tpu_custom_call.1} parent=5 // pred_check
        %p536 = pneg %p535
      $region58: #{tpu_custom_call.1} parent=5 // pred_check_branch
        %538 = sbr.rel (%p536) target = $region60
      $region59: #{tpu_custom_call.1} parent=5 // pred_region
        %s539 = ssub.s32 %s21, 2
        // Predicated region
        $region61: #{tpu_custom_call.1} parent=59 // pred_check
          %p540 = pneg %p174
        $region62: #{tpu_custom_call.1} parent=59 // pred_check_branch
          %542 = sbr.rel (%p540) target = $region64
        $region63: #{tpu_custom_call.1} parent=59 // pred_region
          %s543 = sand.u32 %s159, 1
          %s544 = scalar_lea.sflag [#allocation3], %s543
          %s545 = sand.u32 %s159, 1
          %s546 = smul.addr %s545, 16
          %s547 = scalar_lea.vmem [#allocation7], %s546
          %548 = dma.done %s544, 256
        $region64: #{tpu_custom_call.1} parent=59 // pred_fallthru
          _
        // Predicated region
        $region65: #{tpu_custom_call.1} parent=59 // pred_check
          %p549 = pneg %p202
        $region66: #{tpu_custom_call.1} parent=59 // pred_check_branch
          %551 = sbr.rel (%p549) target = $region68
        $region67: #{tpu_custom_call.1} parent=59 // pred_region
          %s552 = sand.u32 %s187, 1
          %s553 = scalar_lea.sflag [#allocation9], %s552
          %s554 = sand.u32 %s187, 1
          %s555 = smul.addr %s554, 2
          %s556 = scalar_lea.vmem [#allocation8], %s555
          %557 = dma.done %s553, 32
        $region68: #{tpu_custom_call.1} parent=59 // pred_fallthru
          _
      $region60: #{tpu_custom_call.1} parent=5 // pred_fallthru
        _
    $region6: #{tpu_custom_call.1} parent=1 // loop_footer
      %s25 = sadd.s32 1, %s21
    $region7: #{tpu_custom_call.1} parent=1 // loop_footer_branch
      %20 = sbr.rel target = $region3
    $region8: #{tpu_custom_call.1} parent=1 // loop_exit
      _
    %558 = vsyncpa [#allocation3], 1
    %s559 = scalar_lea.sflag [#allocation3], 1
    %560 = vsyncpa %s559, 1
    %561 = vsyncpa [#allocation9], 1
    %s562 = scalar_lea.sflag [#allocation9], 1
    %563 = vsyncpa %s562, 1
    %564 = vsyncpa [#allocation4], 1
    %s565 = scalar_lea.sflag [#allocation4], 1
    %566 = vsyncpa %s565, 1
    %567 = vsyncpa [#allocation6], 1

</llo_original>
